<compile_context>
chip_gen: v7x
topology: tpu7x:2x2x1
jax: 0.10.0
libtpu: 0.0.40
codegen_flags: <defaults>
</compile_context>

<pallas_src>
import jax
import jax.numpy as jnp
from jax.experimental import pallas as pl
from jax.experimental.pallas import tpu as pltpu


def _round_up(n, m):
    return ((n + m - 1) // m) * m


# ----------------------------------------------------------------------------
# Pallas kernel: fused drift+diffusion MLP (one batch block per grid step)
#   h = tanh(x @ W1_cat + b1_cat)          [tb, 2H]  (f32 accumulate / f32 tanh)
#   y = h  @ W2_pad + b2_pad               [tb, 128] (lane-dense output slab)
# ----------------------------------------------------------------------------
def _fused_sde_mlp_kernel(x_ref, w1_ref, b1_ref, w2_ref, b2_ref, o_ref):
    # in-kernel f32 -> bf16 cast for the MXU (free VPU work, no extra HBM pass)
    x = x_ref[...].astype(w1_ref.dtype)                          # [tb, D]  bf16
    # first layer: single MXU op covering both drift and diffusion branches
    h = jnp.dot(x, w1_ref[...], preferred_element_type=jnp.float32)   # [tb, 2H] f32
    h = jnp.tanh(h + b1_ref[...])                                # bias + tanh in f32
    h = h.astype(w2_ref.dtype)                                   # bf16 for the MXU
    # second layer: block-diagonal, zero-padded to 128 output lanes
    y = jnp.dot(h, w2_ref[...], preferred_element_type=jnp.float32)   # [tb, 128] f32
    o_ref[...] = (y + b2_ref[...]).astype(o_ref.dtype)


def fused_mlp_forward(x_f32, w1_cat_bf, b1_cat, w2_pad_bf, b2_pad, *, block_b=128):
    """Batch-gridded pallas_call.

    x is tiled along the batch dim ("parallel" -> sharded across TensorCores on
    v7x, pipelined HBM<->VMEM at large batch); weights/biases use grid-invariant
    index_maps so they are DMA'd once and stay VMEM-resident.
    """
    B, D = x_f32.shape
    H2 = w1_cat_bf.shape[1]
    out_lanes = w2_pad_bf.shape[1]

    # batch block: sublane-aligned (multiple of 8), capped at block_b
    tb = min(block_b, _round_up(B, 8))
    Bp = _round_up(B, tb)
    if Bp != B:
        x_f32 = jnp.pad(x_f32, ((0, Bp - B), (0, 0)))
    grid = (Bp // tb,)

    flops = 2 * Bp * D * H2 + 2 * Bp * H2 * out_lanes
    bytes_accessed = (Bp * D * 4 + w1_cat_bf.size * 2 + b1_cat.size * 4
                      + w2_pad_bf.size * 2 + b2_pad.size * 4 + Bp * out_lanes * 4)

    y = pl.pallas_call(
        _fused_sde_mlp_kernel,
        out_shape=jax.ShapeDtypeStruct((Bp, out_lanes), jnp.float32),
        grid_spec=pltpu.PrefetchScalarGridSpec(
            num_scalar_prefetch=0,
            grid=grid,
            in_specs=[
                pl.BlockSpec((tb, D), lambda i: (i, 0)),          # x: tiled over batch
                pl.BlockSpec((D, H2), lambda i: (0, 0)),          # W1_cat: grid-invariant
                pl.BlockSpec((1, H2), lambda i: (0, 0)),          # b1_cat
                pl.BlockSpec((H2, out_lanes), lambda i: (0, 0)),  # W2_pad
                pl.BlockSpec((1, out_lanes), lambda i: (0, 0)),   # b2_pad
            ],
            out_specs=pl.BlockSpec((tb, out_lanes), lambda i: (i, 0)),
        ),
        compiler_params=pltpu.CompilerParams(
            dimension_semantics=("parallel",)),
        cost_estimate=pl.CostEstimate(
            flops=flops, transcendentals=Bp * H2, bytes_accessed=bytes_accessed),
    )(x_f32, w1_cat_bf, b1_cat, w2_pad_bf, b2_pad)

    return y[:B] if Bp != B else y


# ----------------------------------------------------------------------------
# Fused drift/diffusion net with a one-entry result cache:
# sde.f(t, x) then sde.g(t, x) on the same x costs ONE kernel launch.
# ----------------------------------------------------------------------------
class FusedSDENet:
    def __init__(self, fused_apply):
        self._fused_apply = fused_apply
        self._cached_x = None
        self._cached_out = None

    def _eval(self, x):
        if self._cached_x is not x:                 # identity check, host-side
            self._cached_out = self._fused_apply(x)
            self._cached_x = x
        return self._cached_out

    def drift(self, x):
        return self._eval(x)[0]

    def diffusion(self, x):
        return self._eval(x)[1]


# ----------------------------------------------------------------------------
# SDEFunc wrapper (mirrors the PyTorch module's semantics)
# ----------------------------------------------------------------------------
class SDEFunc:
    def __init__(self, f, g, order=1, noise_type=None, sde_type=None):
        self.order, self.intloss, self.sensitivity = order, None, None
        self.f_func, self.g_func = f, g
        self.nfe = 0                     # host-side counter, as in torchdyn
        self.noise_type = noise_type
        self.sde_type = sde_type

    def forward(self, t, x):
        raise NotImplementedError("Hopefully soon...")

    def f(self, t, x):
        self.nfe += 1
        # f_func takes only x (no 't' in its signature) -> call f_func(x)
        return self.f_func(x)

    def g(self, t, x):
        self.nfe += 1
        # g_func takes only x (no 't' in its signature) -> call g_func(x)
        return self.g_func(x)


# ----------------------------------------------------------------------------
# Parameter construction: two independent MLPs, packed for the fused kernel
# ----------------------------------------------------------------------------
def make_fused_sde_nets(key, d, h, out_lanes=128):
    """Build drift/diffusion MLP params + the packed operands for the fused kernel."""
    assert out_lanes >= 2 * d
    kf1, kf2, kg1, kg2 = jax.random.split(key, 4)
    s1 = 1.0 / jnp.sqrt(d)
    s2 = 1.0 / jnp.sqrt(h)

    def _u(k, shape, scale):
        return (jax.random.uniform(k, shape, jnp.float32) * 2.0 - 1.0) * scale

    # f32 master parameters (also used by the pure-JAX reference)
    w1f, b1f = _u(kf1, (d, h), s1), jnp.zeros((1, h), jnp.float32)
    w2f, b2f = _u(kf2, (h, d), s2), jnp.zeros((1, d), jnp.float32)
    w1g, b1g = _u(kg1, (d, h), s1), jnp.zeros((1, h), jnp.float32)
    w2g, b2g = _u(kg2, (h, d), s2), jnp.zeros((1, d), jnp.float32)

    # --- packed operands for the fused kernel --------------------------------
    # first layer: concatenate along the hidden axis -> one [d, 2h] matmul
    w1_cat = jnp.concatenate([w1f, w1g], axis=1)                 # [d, 2h]
    b1_cat = jnp.concatenate([b1f, b1g], axis=1)                 # [1, 2h]
    # second layer: block-diagonal, zero-padded to a lane-dense 128-wide slab
    w2_pad = jnp.zeros((2 * h, out_lanes), jnp.float32)
    w2_pad = w2_pad.at[:h, :d].set(w2f)                          # drift -> lanes 0..d-1
    w2_pad = w2_pad.at[h:, d:2 * d].set(w2g)                     # diff  -> lanes d..2d-1
    b2_pad = jnp.zeros((1, out_lanes), jnp.float32)
    b2_pad = b2_pad.at[:, :d].set(b2f)
    b2_pad = b2_pad.at[:, d:2 * d].set(b2g)

    # bf16 matmul operands (biases stay f32; accumulation is f32 in-kernel)
    w1_cat_bf = w1_cat.astype(jnp.bfloat16)
    w2_pad_bf = w2_pad.astype(jnp.bfloat16)

    @jax.jit
    def fused_apply(x):
        # x stays f32 here; the bf16 cast happens inside the kernel
        y = fused_mlp_forward(x, w1_cat_bf, b1_cat, w2_pad_bf, b2_pad)
        return y[:, :d], y[:, d:2 * d]                           # (drift, diffusion)

    # shared-evaluation net: .f and .g on the same x cost one kernel launch
    net = FusedSDENet(fused_apply)

    # pure-JAX f32 references
    drift_ref = lambda x: jnp.tanh(x @ w1f + b1f) @ w2f + b2f
    diff_ref = lambda x: jnp.tanh(x @ w1g + b1g) @ w2g + b2g

    return net, drift_ref, diff_ref, fused_apply


if __name__ == "__main__":
    B, D, H = 8, 32, 128  # batch, state dim, hidden dim (2H=256: one MXU N-pass)

    key = jax.random.PRNGKey(0)
    kx, kp, kb = jax.random.split(key, 3)

    x = jax.random.normal(kx, (B, D), jnp.float32)
    t = jnp.float32(0.0)  # unused by f_func / g_func (no 't' in their args)

    net, drift_ref, diff_ref, fused_apply = make_fused_sde_nets(kp, D, H)

    sde = SDEFunc(f=net.drift, g=net.diffusion, order=1,
                  noise_type="diagonal", sde_type="ito")

    # fused path (one kernel launch gives both terms — what a solver step uses)
    f_fused, g_fused = fused_apply(x)
    f_fused = jax.block_until_ready(f_fused)
    g_fused = jax.block_until_ready(g_fused)

    # module-faithful path: .f / .g each bump nfe; the shared cache means the
    # two calls together trigger only a single fused kernel evaluation.
    f_out = jax.block_until_ready(sde.f(t, x))
    g_out = jax.block_until_ready(sde.g(t, x))

    # correctness checks against pure-JAX f32 reference (bf16 matmul tolerance)
    assert f_out.shape == (B, D) and g_out.shape == (B, D)
    assert jnp.allclose(f_out, drift_ref(x), atol=2e-2, rtol=2e-2)
    assert jnp.allclose(g_out, diff_ref(x), atol=2e-2, rtol=2e-2)
    assert jnp.allclose(f_fused, f_out) and jnp.allclose(g_fused, g_out)
    assert sde.nfe == 2

    # amortized / batched-trajectory path: stack many sample paths into one
    # call (exercises the batch grid, non-divisible B -> pad+slice, and the
    # 'parallel' sharding across TensorCores on v7x).
    B_big = 200
    xb = jax.random.normal(kb, (B_big, D), jnp.float32)
    fb, gb = fused_apply(xb)
    fb = jax.block_until_ready(fb)
    gb = jax.block_until_ready(gb)
    assert fb.shape == (B_big, D) and gb.shape == (B_big, D)
    assert jnp.allclose(fb, drift_ref(xb), atol=2e-2, rtol=2e-2)
    assert jnp.allclose(gb, diff_ref(xb), atol=2e-2, rtol=2e-2)

    print("KERNEL_OK")
</pallas_src>

<mosaic_0001>
module attributes {stable_mosaic.version = 11 : i64} {
  func.func @_fused_sde_mlp_kernel(%arg0: i32, %arg1: memref<8x32xf32, #tpu.memory_space<vmem>>, %arg2: memref<32x256xbf16, #tpu.memory_space<vmem>>, %arg3: memref<1x256xf32, #tpu.memory_space<vmem>>, %arg4: memref<256x128xbf16, #tpu.memory_space<vmem>>, %arg5: memref<1x128xf32, #tpu.memory_space<vmem>>, %arg6: memref<8x128xf32, #tpu.memory_space<vmem>>) attributes {dimension_semantics = [#tpu.dimension_semantics<parallel>], iteration_bounds = array<i64: 1>, scalar_prefetch = 0 : i64, scratch_operands = 0 : i64, tpu.core_type = #tpu.core_type<tc>, window_params = [{transform_indices = @transform_0, window_bounds = array<i64: 8, 32>}, {pipeline_mode = #tpu.pipeline_mode<synchronous>, transform_indices = @transform_1, window_bounds = array<i64: 32, 256>}, {pipeline_mode = #tpu.pipeline_mode<synchronous>, transform_indices = @transform_2, window_bounds = array<i64: 1, 256>}, {pipeline_mode = #tpu.pipeline_mode<synchronous>, transform_indices = @transform_3, window_bounds = array<i64: 256, 128>}, {pipeline_mode = #tpu.pipeline_mode<synchronous>, transform_indices = @transform_4, window_bounds = array<i64: 1, 128>}, {transform_indices = @transform_5, window_bounds = array<i64: 8, 128>}]} {
    %c0 = arith.constant 0 : index
    %c0_0 = arith.constant 0 : index
    %0 = vector.load %arg1[%c0, %c0_0] : memref<8x32xf32, #tpu.memory_space<vmem>>, vector<8x32xf32>
    %1 = arith.truncf %0 : vector<8x32xf32> to vector<8x32xbf16>
    %c0_1 = arith.constant 0 : index
    %c0_2 = arith.constant 0 : index
    %2 = vector.load %arg2[%c0_1, %c0_2] : memref<32x256xbf16, #tpu.memory_space<vmem>>, vector<32x256xbf16>
    %cst = arith.constant dense<0.000000e+00> : vector<8x256xf32>
    %3 = tpu.matmul %1, %2, %cst {dimension_numbers = #tpu.dot_dimension_numbers<[1], [0], [0], [1], [0, 0, 1, 1], [], []>} : vector<8x32xbf16>, vector<32x256xbf16>, vector<8x256xf32> -> vector<8x256xf32>
    %c0_3 = arith.constant 0 : index
    %c0_4 = arith.constant 0 : index
    %4 = vector.load %arg3[%c0_3, %c0_4] : memref<1x256xf32, #tpu.memory_space<vmem>>, vector<1x256xf32>
    %5 = vector.broadcast %4 : vector<1x256xf32> to vector<8x256xf32>
    %6 = arith.addf %3, %5 : vector<8x256xf32>
    %7 = math.tanh %6 : vector<8x256xf32>
    %8 = arith.truncf %7 : vector<8x256xf32> to vector<8x256xbf16>
    %c0_5 = arith.constant 0 : index
    %c0_6 = arith.constant 0 : index
    %9 = vector.load %arg4[%c0_5, %c0_6] : memref<256x128xbf16, #tpu.memory_space<vmem>>, vector<256x128xbf16>
    %cst_7 = arith.constant dense<0.000000e+00> : vector<8x128xf32>
    %10 = tpu.matmul %8, %9, %cst_7 {dimension_numbers = #tpu.dot_dimension_numbers<[1], [0], [0], [1], [0, 0, 1, 1], [], []>} : vector<8x256xbf16>, vector<256x128xbf16>, vector<8x128xf32> -> vector<8x128xf32>
    %c0_8 = arith.constant 0 : index
    %c0_9 = arith.constant 0 : index
    %11 = vector.load %arg5[%c0_8, %c0_9] : memref<1x128xf32, #tpu.memory_space<vmem>>, vector<1x128xf32>
    %12 = vector.broadcast %11 : vector<1x128xf32> to vector<8x128xf32>
    %13 = arith.addf %10, %12 : vector<8x128xf32>
    %c0_10 = arith.constant 0 : index
    %c0_11 = arith.constant 0 : index
    %14 = vector.load %arg6[%c0_10, %c0_11] : memref<8x128xf32, #tpu.memory_space<vmem>>, vector<8x128xf32>
    tpu.vector_store %arg6[%c0_10, %c0_11], %13 {strides = array<i32>} : memref<8x128xf32, #tpu.memory_space<vmem>>, vector<8x128xf32>,
    return
  }
  func.func @transform_0(%arg0: i32) -> (i32, i32) {
    %c0_i32 = arith.constant 0 : i32
    %c0_i32_0 = arith.constant 0 : i32
    return %arg0, %c0_i32 : i32, i32
  }
  func.func @transform_1(%arg0: i32) -> (i32, i32) {
    %c0_i32 = arith.constant 0 : i32
    %c0_i32_0 = arith.constant 0 : i32
    %c0_i32_1 = arith.constant 0 : i32
    return %c0_i32, %c0_i32_0 : i32, i32
  }
  func.func @transform_2(%arg0: i32) -> (i32, i32) {
    %c0_i32 = arith.constant 0 : i32
    %c0_i32_0 = arith.constant 0 : i32
    %c0_i32_1 = arith.constant 0 : i32
    return %c0_i32, %c0_i32_0 : i32, i32
  }
  func.func @transform_3(%arg0: i32) -> (i32, i32) {
    %c0_i32 = arith.constant 0 : i32
    %c0_i32_0 = arith.constant 0 : i32
    %c0_i32_1 = arith.constant 0 : i32
    return %c0_i32, %c0_i32_0 : i32, i32
  }
  func.func @transform_4(%arg0: i32) -> (i32, i32) {
    %c0_i32 = arith.constant 0 : i32
    %c0_i32_0 = arith.constant 0 : i32
    %c0_i32_1 = arith.constant 0 : i32
    return %c0_i32, %c0_i32_0 : i32, i32
  }
  func.func @transform_5(%arg0: i32) -> (i32, i32) {
    %c0_i32 = arith.constant 0 : i32
    %c0_i32_0 = arith.constant 0 : i32
    return %arg0, %c0_i32 : i32, i32
  }
}

</mosaic_0001>

<llo_original>
// kernel: fused_apply.1
$region0: #{fused_apply.1}
  #allocation0 [shape = 'u32[]', space=smem, size = 0x4, offset = 0x4, fixed_abs, tag = 'smem constant byte address 0x4 - core index']
  #allocation1 [shape = 'u32[144,128]{1,0:T(1,128)}', space=vmem, size = 0x12000, scoped, tag = 'internal scratch']
  %s0 = inlined_call_operand.vmem [shape: f32[8,32], index: 0, kind: input, shape index: {}]
  %s1 = inlined_call_operand.vmem [shape: bf16[32,256], index: 1, kind: input, shape index: {}]
  %s2 = inlined_call_operand.vmem [shape: f32[1,256], index: 2, kind: input, shape index: {}]
  %s3 = inlined_call_operand.hbm [shape: bf16[256,128], index: 3, kind: input, shape index: {}]
  %s4 = inlined_call_operand.vmem [shape: f32[1,128], index: 4, kind: input, shape index: {}]
  %s5 = inlined_call_operand.vmem [shape: f32[8,128], index: 5, kind: output, shape index: {}]
  %s6 = sld [smem:[#allocation0]]
  $region34: #{fused_apply.1} parent=0
    _
  %s8 = ssub.s32 1, %s6
  %s9 = scalar_select 0, %s8, %s6
  $region1: #{fused_apply.1} parent=0
    #allocation2 [shape = 'u8[65536]{0}', space=vmem, size = 0x10000, scoped, tag = 'input window, operand 3, single buffered']
    #allocation3 [shape = 's32[1]{0}', space=sflag, size = 0x4, scoped, tag = 'scoped memory for fused_apply.1']
    %10 = vsyncpa [#allocation3], 0
    // Predicated region
    $region2: #{fused_apply.1} parent=1 // pred_check
      _
    $region3: #{fused_apply.1} parent=1 // pred_check_branch
      %12 = sbr.rel (0) target = $region5
    $region4: #{fused_apply.1} parent=1 // pred_region
      _
    $region5: #{fused_apply.1} parent=1 // pred_fallthru
      _
    // Predicated region
    $region6: #{fused_apply.1} parent=1 // pred_check
      _
    $region7: #{fused_apply.1} parent=1 // pred_check_branch
      %14 = sbr.rel (0) target = $region9
    $region8: #{fused_apply.1} parent=1 // pred_region
      _
    $region9: #{fused_apply.1} parent=1 // pred_fallthru
      _
    // Predicated region
    $region10: #{fused_apply.1} parent=1 // pred_check
      _
    $region11: #{fused_apply.1} parent=1 // pred_check_branch
      %16 = sbr.rel (0) target = $region13
    $region12: #{fused_apply.1} parent=1 // pred_region
      _
    $region13: #{fused_apply.1} parent=1 // pred_fallthru
      _
    // Predicated region
    $region14: #{fused_apply.1} parent=1 // pred_check
      _
    $region15: #{fused_apply.1} parent=1 // pred_check_branch
      %18 = sbr.rel (0) target = $region17
    $region16: #{fused_apply.1} parent=1 // pred_region
      %s20 = ssub.s32 2048, 2048
      %21 = vsyncadd [#allocation3], %s20
      %s22 = sshll.u32 [#allocation2], 4
      %s23 = int_to_ptr.vmem [resolvable:$true] %s22
      %28 = dma.hbm_to_vmem [thread:$0]  %s3, 2048, %s23, [#allocation3], 64, 64, 4
    $region17: #{fused_apply.1} parent=1 // pred_fallthru
      _
    // Predicated region
    $region18: #{fused_apply.1} parent=1 // pred_check
      _
    $region19: #{fused_apply.1} parent=1 // pred_check_branch
      %30 = sbr.rel (0) target = $region21
    $region20: #{fused_apply.1} parent=1 // pred_region
      _
    $region21: #{fused_apply.1} parent=1 // pred_fallthru
      _
    // Predicated region
    $region22: #{fused_apply.1} parent=1 // pred_check
      _
    $region23: #{fused_apply.1} parent=1 // pred_check_branch
      %32 = sbr.rel (0) target = $region25
    $region24: #{fused_apply.1} parent=1 // pred_region
      %33 = dma.done [#allocation3], 2048
    $region25: #{fused_apply.1} parent=1 // pred_fallthru
      _
    %v35 = vld [vmem:[%s0] sm:$0xff]
    %v36 = vpack.c.bf16 %v35, %v35
    %v37 = vld [vmem:[%s1] sm:$0xff]
    %v38 = vld [vmem:[%s1 + $0x8] sm:$0xff]
    %v39 = vld [vmem:[%s1 + $0x10] sm:$0xff]
    %v40 = vld [vmem:[%s1 + $0x18] sm:$0xff]
    %v41 = vld [vmem:[%s2] sm:$0x3]
    %v43 = vlaneseq
    %v44 = vshrl.u32 %v43, 7
    %v45 = vsub.s32 0, %v44
    %v46 = vrot.slane %v41, %v45
    %v47 = vlaneseq
    %v48 = vshrl.u32 %v47, 7
    %v49 = vsub.s32 1, %v48
    %v50 = vrot.slane %v41, %v49
    %v57 = vunpack.c.l.b16 %v37
    %v58 = vunpack.c.h.b16 %v37
    %v59 = vunpack.c.l.b16 %v38
    %v60 = vunpack.c.h.b16 %v38
    %v61 = vunpack.c.l.b16 %v39
    %v62 = vunpack.c.h.b16 %v39
    %v63 = vunpack.c.l.b16 %v40
    %v64 = vunpack.c.h.b16 %v40
    %v65 = vpack.c.b16 %v59, %v57
    %v66 = vpack.c.b16 %v60, %v58
    %v67 = vpack.c.b16 %v63, %v61
    %v68 = vpack.c.b16 %v64, %v62
    %vm73 = vcmask 261120
    %v75 = vsel %vm73, %v36, 0
    %77 = vmatprep.subr.bf16.mxu0 %v66
    %78 = vmatpush1.bf16.msra.mxu0 %v65
    %79 = vmatprep.subr.bf16.mxu0 %v68
    %80 = vmatpush1.bf16.msra.mxu0 %v67
    %81 = vmatprep.subr.bf16.mxu0 0
    %82 = vmatpush1.bf16.msra.mxu0 0
    %83 = vmatprep.subr.bf16.mxu0 0
    %84 = vmatpush1.bf16.msra.mxu0 0
    %85 = vmatprep.subr.bf16.mxu0 0
    %86 = vmatpush1.bf16.msra.mxu0 0
    %87 = vmatprep.subr.bf16.mxu0 0
    %88 = vmatpush1.bf16.msra.mxu0 0
    %89 = vmatprep.subr.bf16.mxu0 0
    %90 = vmatpush1.bf16.msra.mxu0 0
    %91 = vmatprep.subr.bf16.mxu0 0
    %92 = vmatpush1.bf16.msra.mxu0 0
    %93 = vmatprep.subr.bf16.mxu0 0
    %94 = vmatpush1.bf16.msra.mxu0 0
    %95 = vmatprep.subr.bf16.mxu0 0
    %96 = vmatpush1.bf16.msra.mxu0 0
    %97 = vmatprep.subr.bf16.mxu0 0
    %98 = vmatpush1.bf16.msra.mxu0 0
    %99 = vmatprep.subr.bf16.mxu0 0
    %100 = vmatpush1.bf16.msra.mxu0 0
    %101 = vmatprep.subr.bf16.mxu0 0
    %102 = vmatpush1.bf16.msra.mxu0 0
    %103 = vmatprep.subr.bf16.mxu0 0
    %104 = vmatpush1.bf16.msra.mxu0 0
    %105 = vmatprep.subr.bf16.mxu0 0
    %106 = vmatpush1.bf16.msra.mxu0 0
    %107 = vmatprep.subr.bf16.mxu0 0
    %108 = vmatpush1.bf16.msra.mxu0 0
    %109 = vmatprep.mubr.bf16.mxu0 0
    %110 = vmatmul.mubr.bf16.gmra.mrb[0].mxu0 %v75
    %v111 = vpop.f32.mrb[0].mxu0
    %v112 = vadd.f32 %v46, %v111
    %v113 = vpop.f32.mrb[0].mxu0
    %v114 = vadd.f32 %v50, %v113
    %v115 = vpop.f32.mrb[0].mxu0
    %v116 = vpop.f32.mrb[0].mxu0
    %117 = vdwg.mxu0
    %v118 = vtanh.pop %v112
    %v119 = vtanh.pop %v114
    %v120 = vpack.c.bf16 %v118, %v118
    %v121 = vpack.c.bf16 %v119, %v119
    %v122 = vld [vmem:[#allocation2] sm:$0xf]
    %v123 = vld [vmem:[#allocation2 + $0x4] sm:$0xf]
    %v124 = vld [vmem:[#allocation2 + $0x8] sm:$0xf]
    %v125 = vld [vmem:[#allocation2 + $0xc] sm:$0xf]
    %v126 = vld [vmem:[#allocation2 + $0x10] sm:$0xf]
    %v127 = vld [vmem:[#allocation2 + $0x14] sm:$0xf]
    %v128 = vld [vmem:[#allocation2 + $0x18] sm:$0xf]
    %v129 = vld [vmem:[#allocation2 + $0x1c] sm:$0xf]
    %v130 = vld [vmem:[#allocation2 + $0x20] sm:$0xf]
    %v131 = vld [vmem:[#allocation2 + $0x24] sm:$0xf]
    %v132 = vld [vmem:[#allocation2 + $0x28] sm:$0xf]
    %v133 = vld [vmem:[#allocation2 + $0x2c] sm:$0xf]
    %v134 = vld [vmem:[#allocation2 + $0x30] sm:$0xf]
    %v135 = vld [vmem:[#allocation2 + $0x34] sm:$0xf]
    %v136 = vld [vmem:[#allocation2 + $0x38] sm:$0xf]
    %v137 = vld [vmem:[#allocation2 + $0x3c] sm:$0xf]
    %v138 = vld [vmem:[#allocation2 + $0x40] sm:$0xf]
    %v139 = vld [vmem:[#allocation2 + $0x44] sm:$0xf]
    %v140 = vld [vmem:[#allocation2 + $0x48] sm:$0xf]
    %v141 = vld [vmem:[#allocation2 + $0x4c] sm:$0xf]
    %v142 = vld [vmem:[#allocation2 + $0x50] sm:$0xf]
    %v143 = vld [vmem:[#allocation2 + $0x54] sm:$0xf]
    %v144 = vld [vmem:[#allocation2 + $0x58] sm:$0xf]
    %v145 = vld [vmem:[#allocation2 + $0x5c] sm:$0xf]
    %v146 = vld [vmem:[#allocation2 + $0x60] sm:$0xf]
    %v147 = vld [vmem:[#allocation2 + $0x64] sm:$0xf]
    %v148 = vld [vmem:[#allocation2 + $0x68] sm:$0xf]
    %v149 = vld [vmem:[#allocation2 + $0x6c] sm:$0xf]
    %v150 = vld [vmem:[#allocation2 + $0x70] sm:$0xf]
    %v151 = vld [vmem:[#allocation2 + $0x74] sm:$0xf]
    %v152 = vld [vmem:[#allocation2 + $0x78] sm:$0xf]
    %v153 = vld [vmem:[#allocation2 + $0x7c] sm:$0xf]
    %v154 = vld [vmem:[%s4] sm:$0x1]
    %v156 = vlaneseq
    %v157 = vshrl.u32 %v156, 7
    %v158 = vsub.s32 0, %v157
    %v159 = vrot.slane %v154, %v158
    %v193 = vunpack.c.l.b16 %v122
    %v194 = vunpack.c.l.b16 %v123
    %v195 = vunpack.c.l.b16 %v124
    %v196 = vunpack.c.l.b16 %v125
    %v197 = vunpack.c.l.b16 %v126
    %v198 = vunpack.c.l.b16 %v127
    %v199 = vunpack.c.l.b16 %v128
    %v200 = vunpack.c.l.b16 %v129
    %v201 = vunpack.c.l.b16 %v130
    %v202 = vunpack.c.l.b16 %v131
    %v203 = vunpack.c.l.b16 %v132
    %v204 = vunpack.c.l.b16 %v133
    %v205 = vunpack.c.l.b16 %v134
    %v206 = vunpack.c.l.b16 %v135
    %v207 = vunpack.c.l.b16 %v136
    %v208 = vunpack.c.l.b16 %v137
    %v209 = vunpack.c.l.b16 %v138
    %v210 = vunpack.c.l.b16 %v139
    %v211 = vunpack.c.l.b16 %v140
    %v212 = vunpack.c.l.b16 %v141
    %v213 = vunpack.c.l.b16 %v142
    %v214 = vunpack.c.l.b16 %v143
    %v215 = vunpack.c.l.b16 %v144
    %v216 = vunpack.c.l.b16 %v145
    %v217 = vunpack.c.l.b16 %v146
    %v218 = vunpack.c.l.b16 %v147
    %v219 = vunpack.c.l.b16 %v148
    %v220 = vunpack.c.l.b16 %v149
    %v221 = vunpack.c.l.b16 %v150
    %v222 = vunpack.c.l.b16 %v151
    %v223 = vunpack.c.l.b16 %v152
    %v224 = vunpack.c.l.b16 %v153
    %v225 = vpack.c.b16 %v194, %v193
    %v226 = vpack.c.b16 %v196, %v195
    %v227 = vpack.c.b16 %v198, %v197
    %v228 = vpack.c.b16 %v200, %v199
    %v229 = vpack.c.b16 %v202, %v201
    %v230 = vpack.c.b16 %v204, %v203
    %v231 = vpack.c.b16 %v206, %v205
    %v232 = vpack.c.b16 %v208, %v207
    %v233 = vpack.c.b16 %v210, %v209
    %v234 = vpack.c.b16 %v212, %v211
    %v235 = vpack.c.b16 %v214, %v213
    %v236 = vpack.c.b16 %v216, %v215
    %v237 = vpack.c.b16 %v218, %v217
    %v238 = vpack.c.b16 %v220, %v219
    %v239 = vpack.c.b16 %v222, %v221
    %v240 = vpack.c.b16 %v224, %v223
    %257 = vmatprep.subr.bf16.mxu0 0
    %258 = vmatpush1.bf16.msra.mxu0 %v225
    %259 = vmatprep.subr.bf16.mxu0 0
    %260 = vmatpush1.bf16.msra.mxu0 %v226
    %261 = vmatprep.subr.bf16.mxu0 0
    %262 = vmatpush1.bf16.msra.mxu0 %v227
    %263 = vmatprep.subr.bf16.mxu0 0
    %264 = vmatpush1.bf16.msra.mxu0 %v228
    %265 = vmatprep.subr.bf16.mxu0 0
    %266 = vmatpush1.bf16.msra.mxu0 %v229
    %267 = vmatprep.subr.bf16.mxu0 0
    %268 = vmatpush1.bf16.msra.mxu0 %v230
    %269 = vmatprep.subr.bf16.mxu0 0
    %270 = vmatpush1.bf16.msra.mxu0 %v231
    %271 = vmatprep.subr.bf16.mxu0 0
    %272 = vmatpush1.bf16.msra.mxu0 %v232
    %273 = vmatprep.subr.bf16.mxu0 0
    %274 = vmatpush1.bf16.msra.mxu0 %v233
    %275 = vmatprep.subr.bf16.mxu0 0
    %276 = vmatpush1.bf16.msra.mxu0 %v234
    %277 = vmatprep.subr.bf16.mxu0 0
    %278 = vmatpush1.bf16.msra.mxu0 %v235
    %279 = vmatprep.subr.bf16.mxu0 0
    %280 = vmatpush1.bf16.msra.mxu0 %v236
    %281 = vmatprep.subr.bf16.mxu0 0
    %282 = vmatpush1.bf16.msra.mxu0 %v237
    %283 = vmatprep.subr.bf16.mxu0 0
    %284 = vmatpush1.bf16.msra.mxu0 %v238
    %285 = vmatprep.subr.bf16.mxu0 0
    %286 = vmatpush1.bf16.msra.mxu0 %v239
    %287 = vmatprep.subr.bf16.mxu0 0
    %288 = vmatpush1.bf16.msra.mxu0 %v240
    %289 = vmatprep.mubr.bf16.mxu0 %v121
    %290 = vmatmul.mubr.bf16.gmra.mrb[0].mxu0 %v120
    %v291 = vpop.f32.mrb[0].mxu0
    %v292 = vadd.f32 %v159, %v291
    %v293 = vpop.f32.mrb[0].mxu0
    %v294 = vpop.f32.mrb[0].mxu0
    %v295 = vpop.f32.mrb[0].mxu0
    %296 = vdwg.mxu0
    %297 = vst [vmem:[%s5] sm:$0xff] %v292
    // Predicated region
    $region26: #{fused_apply.1} parent=1 // pred_check
      _
    $region27: #{fused_apply.1} parent=1 // pred_check_branch
      %299 = sbr.rel (0) target = $region29
    $region28: #{fused_apply.1} parent=1 // pred_region
      _
    $region29: #{fused_apply.1} parent=1 // pred_fallthru
      _
    // Predicated region
    $region30: #{fused_apply.1} parent=1 // pred_check
      _
    $region31: #{fused_apply.1} parent=1 // pred_check_branch
      %301 = sbr.rel (0) target = $region33
    $region32: #{fused_apply.1} parent=1 // pred_region
      _
    $region33: #{fused_apply.1} parent=1 // pred_fallthru
      _
    %302 = vsyncpa [#allocation3], 1

</llo_original>
